<compile_context>
chip_gen: v5e
topology: v5e:2x2
jax: 0.10.0
libtpu: 0.0.40
codegen_flags: <defaults>
</compile_context>

<pallas_src>
import numpy as np

import jax
import jax.numpy as jnp
from jax.experimental import pallas as pl
from jax.experimental.pallas import tpu as pltpu


def _drop_path_kernel(scale_ref, x_ref, o_ref):
    """scale_ref: VMEM (TN, 1) f32; x_ref / o_ref: VMEM (TN, TF) in x.dtype."""
    scale = scale_ref[...].astype(x_ref.dtype)      # (TN, 1), cheap cast
    o_ref[...] = x_ref[...] * scale                 # broadcast over lanes


def drop_path(x, drop_prob: float = 0.0, training: bool = False, seed: int = 0):
    """JAX/Pallas equivalent of drop_path_f (per-sample stochastic depth)."""
    if drop_prob == 0.0 or not training:
        return x
    # Note: drop_prob == 1.0 divides by zero, same as the PyTorch reference.
    keep_prob = 1.0 - drop_prob

    n = x.shape[0]
    feat = int(np.prod(x.shape[1:]))
    x2 = x.reshape(n, feat)

    # Per-sample mask: random_tensor = floor(keep_prob + U[0,1)) in {0, 1};
    # scale = random_tensor / keep_prob.  Tiny (N, 1) array, computed host-side
    # of the kernel with the standard JAX PRNG (works on TPU and in interpret).
    key = jax.random.PRNGKey(seed)
    u = jax.random.uniform(key, (n, 1), dtype=jnp.float32)
    random_tensor = jnp.floor(jnp.float32(keep_prob) + u)
    scale = random_tensor * jnp.float32(1.0 / keep_prob)          # (N, 1) f32

    # Tile sizes: lane-dense feature tiles (multiple of 128 or the full extent),
    # sublane tiles a multiple of 8 (or the full extent).  (256, 2048) f32 tiles
    # are 2 MiB each -> 2 operands x 2 pipeline buffers stays well under the
    # default scoped VMEM limit on every generation (v5e 16 MiB ... v7x 32 MiB).
    tn = n if n < 256 else 256
    tf = feat if feat <= 2048 else 2048
    grid = (pl.cdiv(n, tn), pl.cdiv(feat, tf))

    out = pl.pallas_call(
        _drop_path_kernel,
        out_shape=jax.ShapeDtypeStruct((n, feat), x.dtype),
        grid=grid,
        in_specs=[
            pl.BlockSpec((tn, 1), lambda i, j: (i, 0)),    # per-sample scale
            pl.BlockSpec((tn, tf), lambda i, j: (i, j)),   # input tile
        ],
        out_specs=pl.BlockSpec((tn, tf), lambda i, j: (i, j)),
        compiler_params=pltpu.CompilerParams(
            # Batch-tile axis is independent -> shard across TCs on v7x.
            dimension_semantics=("parallel", "arbitrary"),
        ),
    )(scale, x2)

    return out.reshape(x.shape)


class DropPath:
    """Mirror of the PyTorch DropPath module (forward only)."""

    def __init__(self, drop_prob=None):
        self.drop_prob = drop_prob
        self.training = True

    def __call__(self, x, seed: int = 0):
        p = 0.0 if self.drop_prob is None else float(self.drop_prob)
        return drop_path(x, p, self.training, seed)


if __name__ == "__main__":
    key = jax.random.PRNGKey(0)
    x = jax.random.normal(key, (2, 4, 16, 16), dtype=jnp.float32)

    # Training mode with non-zero drop prob: exercises the Pallas kernel.
    mod = DropPath(drop_prob=0.25)
    mod.training = True
    y = jax.block_until_ready(mod(x, seed=123))

    # Each sample must be exactly 0 or x / keep_prob.
    keep_prob = 1.0 - 0.25
    ok = True
    for i in range(x.shape[0]):
        yi = np.asarray(y[i])
        xi = np.asarray(x[i])
        is_zero = np.allclose(yi, 0.0)
        is_scaled = np.allclose(yi, xi / keep_prob, rtol=1e-5, atol=1e-5)
        ok &= bool(is_zero or is_scaled)

    # Eval mode / zero prob -> identity (no kernel launch needed).
    mod.training = False
    y_eval = jax.block_until_ready(mod(x, seed=123))
    ok &= bool(np.allclose(np.asarray(y_eval), np.asarray(x)))

    assert ok, "DropPath semantics mismatch"
    print("KERNEL_OK")
</pallas_src>

<mosaic_0001>
module attributes {stable_mosaic.version = 11 : i64} {
  func.func @_drop_path_kernel(%arg0: i32, %arg1: i32, %arg2: memref<2x1xf32, #tpu.memory_space<vmem>>, %arg3: memref<2x1024xf32, #tpu.memory_space<vmem>>, %arg4: memref<2x1024xf32, #tpu.memory_space<vmem>>) attributes {dimension_semantics = [#tpu.dimension_semantics<parallel>, #tpu.dimension_semantics<arbitrary>], iteration_bounds = array<i64: 1, 1>, scalar_prefetch = 0 : i64, scratch_operands = 0 : i64, tpu.core_type = #tpu.core_type<tc>, window_params = [{transform_indices = @transform_0, window_bounds = array<i64: 2, 1>}, {transform_indices = @transform_1, window_bounds = array<i64: 2, 1024>}, {transform_indices = @transform_2, window_bounds = array<i64: 2, 1024>}]} {
    %c0 = arith.constant 0 : index
    %c0_0 = arith.constant 0 : index
    %0 = vector.load %arg2[%c0, %c0_0] : memref<2x1xf32, #tpu.memory_space<vmem>>, vector<2x1xf32>
    %c0_1 = arith.constant 0 : index
    %c0_2 = arith.constant 0 : index
    %1 = vector.load %arg3[%c0_1, %c0_2] : memref<2x1024xf32, #tpu.memory_space<vmem>>, vector<2x1024xf32>
    %2 = vector.broadcast %0 : vector<2x1xf32> to vector<2x1024xf32>
    %3 = arith.mulf %1, %2 : vector<2x1024xf32>
    %c0_3 = arith.constant 0 : index
    %c0_4 = arith.constant 0 : index
    %4 = vector.load %arg4[%c0_3, %c0_4] : memref<2x1024xf32, #tpu.memory_space<vmem>>, vector<2x1024xf32>
    tpu.vector_store %arg4[%c0_3, %c0_4], %3 {strides = array<i32>} : memref<2x1024xf32, #tpu.memory_space<vmem>>, vector<2x1024xf32>,
    return
  }
  func.func @transform_0(%arg0: i32, %arg1: i32) -> (i32, i32) {
    %c0_i32 = arith.constant 0 : i32
    %c0_i32_0 = arith.constant 0 : i32
    return %arg0, %c0_i32 : i32, i32
  }
  func.func @transform_1(%arg0: i32, %arg1: i32) -> (i32, i32) {
    %c0_i32 = arith.constant 0 : i32
    return %arg0, %arg1 : i32, i32
  }
  func.func @transform_2(%arg0: i32, %arg1: i32) -> (i32, i32) {
    %c0_i32 = arith.constant 0 : i32
    return %arg0, %arg1 : i32, i32
  }
}

</mosaic_0001>

<llo_original>
// kernel: tpu_custom_call.1
$region0: #{tpu_custom_call.1}
  #allocation0 [shape = 'u32[]', space=smem, size = 0x4, offset = 0x4, fixed_abs, tag = 'smem constant byte address 0x4 - core index']
  #allocation1 [shape = 'u32[72,128]{1,0:T(1,128)}', space=vmem, size = 0x9000, scoped, tag = 'internal scratch']
  %s0 = inlined_call_operand.vmem [shape: f32[2,1], index: 0, kind: input, shape index: {}]
  %s1 = inlined_call_operand.hbm [shape: f32[2,1024], index: 1, kind: input, shape index: {}]
  %s2 = inlined_call_operand.hbm [shape: f32[2,1024], index: 2, kind: output, shape index: {}]
  %s3 = sld [smem:[#allocation0]]
  $region22: #{tpu_custom_call.1} parent=0
    _
  %s5 = ssub.s32 1, %s3
  %s6 = scalar_select 0, %s5, %s3
  $region1: #{tpu_custom_call.1} parent=0
    #allocation2 [shape = 'u8[8192]{0}', space=vmem, size = 0x2000, scoped, tag = 'input window, operand 1, single buffered']
    #allocation3 [shape = 's32[1]{0}', space=sflag, size = 0x4, scoped, tag = 'scoped memory for tpu_custom_call.1']
    #allocation4 [shape = 's32[1]{0}', space=sflag, size = 0x4, scoped, tag = 'scoped memory for tpu_custom_call.1']
    #allocation5 [shape = 'u8[8192]{0}', space=vmem, size = 0x2000, scoped, tag = 'output window, operand 0, single buffered']
    %7 = vsyncpa [#allocation3], 0
    %8 = vsyncpa [#allocation4], 0
    // Predicated region
    $region2: #{tpu_custom_call.1} parent=1 // pred_check
      _
    $region3: #{tpu_custom_call.1} parent=1 // pred_check_branch
      %10 = sbr.rel (0) target = $region5
    $region4: #{tpu_custom_call.1} parent=1 // pred_region
      _
    $region5: #{tpu_custom_call.1} parent=1 // pred_fallthru
      _
    // Predicated region
    $region6: #{tpu_custom_call.1} parent=1 // pred_check
      _
    $region7: #{tpu_custom_call.1} parent=1 // pred_check_branch
      %12 = sbr.rel (0) target = $region9
    $region8: #{tpu_custom_call.1} parent=1 // pred_region
      %14 = vsyncadd [#allocation3], 0
      %s16 = sshll.u32 %s1, 4
      %s17 = int_to_ptr.hbm [resolvable:$true] %s16
      %s18 = sshll.u32 [#allocation2], 4
      %s19 = int_to_ptr.vmem [resolvable:$true] %s18
      %21 = dma.hbm_to_vmem [thread:$0]  %s17, 256, %s19, [#allocation3]
    $region9: #{tpu_custom_call.1} parent=1 // pred_fallthru
      _
    // Predicated region
    $region10: #{tpu_custom_call.1} parent=1 // pred_check
      _
    $region11: #{tpu_custom_call.1} parent=1 // pred_check_branch
      %23 = sbr.rel (0) target = $region13
    $region12: #{tpu_custom_call.1} parent=1 // pred_region
      %25 = dma.done [#allocation3], 256
    $region13: #{tpu_custom_call.1} parent=1 // pred_fallthru
      _
    %v26 = vld [vmem:[%s0] sm:$0x3]
    %v27 = vld [vmem:[#allocation2] sm:$0xff]
    %v28 = vld [vmem:[#allocation2 + $0x8] sm:$0xff]
    %30 = vset.pattern.permute.xlu0 0
    %31 = vperm.xlu0 %30, %v26
    %v32 = vpop.permute.xlu0 %31
    %v34 = vunpack.c.l.s4 269488144
    %v35 = vunpack.c.0.s8 %v34
    %v36 = vperm.slane %v32, %v35
    %v38 = vmul.f32 %v27, %v36
    %v39 = vmul.f32 %v28, %v36
    %40 = vst [vmem:[#allocation5] sm:$0xff] %v38
    %41 = vst [vmem:[#allocation5 + $0x8] sm:$0xff] %v39
    // Predicated region
    $region14: #{tpu_custom_call.1} parent=1 // pred_check
      _
    $region15: #{tpu_custom_call.1} parent=1 // pred_check_branch
      %43 = sbr.rel (0) target = $region17
    $region16: #{tpu_custom_call.1} parent=1 // pred_region
      %45 = vsyncadd [#allocation4], 0
      %s47 = sshll.u32 [#allocation5], 4
      %s48 = int_to_ptr.vmem [resolvable:$true] %s47
      %s49 = sshll.u32 %s2, 4
      %s50 = int_to_ptr.hbm [resolvable:$true] %s49
      %52 = dma.vmem_to_hbm [thread:$0]  %s48, 256, %s50, [#allocation4]
    $region17: #{tpu_custom_call.1} parent=1 // pred_fallthru
      _
    // Predicated region
    $region18: #{tpu_custom_call.1} parent=1 // pred_check
      _
    $region19: #{tpu_custom_call.1} parent=1 // pred_check_branch
      %54 = sbr.rel (0) target = $region21
    $region20: #{tpu_custom_call.1} parent=1 // pred_region
      %56 = dma.done [#allocation4], 256
    $region21: #{tpu_custom_call.1} parent=1 // pred_fallthru
      _
    %57 = vsyncpa [#allocation3], 1
    %58 = vsyncpa [#allocation4], 1

</llo_original>
